<compile_context>
chip_gen: v7x
topology: tpu7x:2x2x1
jax: 0.10.0
libtpu: 0.0.40
codegen_flags: <defaults>
</compile_context>

<pallas_src>
import jax
import jax.numpy as jnp
from jax.experimental import pallas as pl
from jax.experimental.pallas import tpu as pltpu

_LANES = 128


def _sph_iou_loss_kernel(n_ref, x_ref, out_ref):
    # n_ref:   SMEM int32[1]                -- number of valid boxes
    # x_ref:   VMEM f32[8, TILE_ROWS, 128]  -- packed components
    #            rows 0..3 = pred   (th, ph, fov_x, fov_y)
    #            rows 4..7 = target (th, ph, fov_x, fov_y)
    # out_ref: VMEM f32[1, 128]             -- per-slice lane-wise partial sums
    t = pl.program_id(1)

    @pl.when(t == 0)
    def _():
        out_ref[...] = jnp.zeros_like(out_ref)

    th1, ph1, a1, b1 = x_ref[0], x_ref[1], x_ref[2], x_ref[3]
    th2, ph2, a2, b2 = x_ref[4], x_ref[5], x_ref[6], x_ref[7]

    # TODO(synk): the reference `Sph().sphIoU` implementation was not provided
    # with the module; this is the FoV-space spherical IoU approximation
    # (cos-latitude corrected longitude, planar FoV-rectangle areas). The
    # rotation angle (5th box component) is ignored because exact rotated
    # spherical-rectangle clipping has no clean closed form.
    eps = jnp.float32(1e-8)
    dth = (th1 - th2) * jnp.cos(0.5 * (ph1 + ph2))
    dph = ph1 - ph2

    left = jnp.maximum(-0.5 * a1, dth - 0.5 * a2)
    right = jnp.minimum(0.5 * a1, dth + 0.5 * a2)
    bot = jnp.maximum(-0.5 * b1, dph - 0.5 * b2)
    top = jnp.minimum(0.5 * b1, dph + 0.5 * b2)
    iw = jnp.maximum(right - left, 0.0)
    ih = jnp.maximum(top - bot, 0.0)

    inter = iw * ih
    union = a1 * b1 + a2 * b2 - inter
    # Divide moved onto the EUP slot (free alongside the VALU work).
    iou = inter * pl.reciprocal(union + eps, approx=True)

    # Mask padded boxes (global index >= N).
    rows, lanes = iou.shape
    block_idx = pl.program_id(0) * pl.num_programs(1) + t
    r = jax.lax.broadcasted_iota(jnp.int32, iou.shape, 0)
    l = jax.lax.broadcasted_iota(jnp.int32, iou.shape, 1)
    gidx = (block_idx * rows + r) * lanes + l
    contrib = jnp.where(gidx < n_ref[0], 1.0 - iou, 0.0)

    # Cheap sublane reduce only; the cross-lane/cross-slice reduce is done in
    # the wrapper on a (P, 128) array.
    out_ref[...] += contrib.sum(axis=0, keepdims=True)


def spherical_iou_loss(preds, targets, *, tile_rows=32, num_parallel=2):
    """preds, targets: [N, 5] f32 (center_x, center_y, fov_x, fov_y, angle)."""
    preds = jnp.asarray(preds, jnp.float32)
    targets = jnp.asarray(targets, jnp.float32)
    n = preds.shape[0]

    # Tiling: tile_rows * 128 boxes per inner tile (~4096 lanes => ~128 KiB
    # input block, ~256 KiB double-buffered: safe on v5e/v6e/v7x VMEM limits).
    tile_boxes = tile_rows * _LANES
    num_tiles = max(1, -(-n // tile_boxes))
    p_split = max(1, min(num_parallel, num_tiles))   # outer parallel slices
    tiles_per_slice = -(-num_tiles // p_split)
    num_tiles = p_split * tiles_per_slice
    n_pad = num_tiles * tile_boxes

    # Pack the 4 used components of preds and targets into one [8, rows, 128]
    # component-major array (angle column dropped; see kernel TODO).
    packed = jnp.concatenate([preds[:, :4], targets[:, :4]], axis=1)  # [N, 8]
    packed = jnp.pad(packed, ((0, n_pad - n), (0, 0)))                # [N_pad, 8]
    packed = packed.T.reshape(8, n_pad // _LANES, _LANES)             # [8, rows, 128]

    n_arr = jnp.array([n], dtype=jnp.int32)

    partials = pl.pallas_call(
        _sph_iou_loss_kernel,
        out_shape=jax.ShapeDtypeStruct((p_split, _LANES), jnp.float32),
        grid_spec=pltpu.PrefetchScalarGridSpec(
            num_scalar_prefetch=1,
            grid=(p_split, tiles_per_slice),
            in_specs=[
                pl.BlockSpec(
                    (8, tile_rows, _LANES),
                    lambda p, t, n_ref: (0, p * tiles_per_slice + t, 0),
                ),
            ],
            out_specs=pl.BlockSpec((1, _LANES), lambda p, t, n_ref: (p, 0)),
        ),
        compiler_params=pltpu.CompilerParams(
            # Outer axis shards across TensorCores on multi-TC chips (v7x);
            # inner axis is the sequential reduction over lane tiles.
            dimension_semantics=("parallel", "arbitrary"),
        ),
    )(n_arr, packed)

    # Tiny finalize: sum P*128 partials, divide by N (guarded against N == 0).
    return jnp.sum(partials) / jnp.float32(max(n, 1))


if __name__ == "__main__":
    key = jax.random.PRNGKey(0)
    k1, k2, k3, k4 = jax.random.split(key, 4)
    N = 8  # number of boxes

    # Deterministic synthetic spherical boxes: [N, 5]
    centers_p = jax.random.uniform(k1, (N, 2), minval=-1.0, maxval=1.0)
    fovs_p = jax.random.uniform(k2, (N, 2), minval=0.2, maxval=1.0)
    ang_p = jax.random.uniform(k1, (N, 1), minval=-0.5, maxval=0.5)
    preds = jnp.concatenate([centers_p, fovs_p, ang_p], axis=1)

    centers_t = centers_p + 0.05 * jax.random.normal(k3, (N, 2))
    fovs_t = jnp.clip(fovs_p + 0.05 * jax.random.normal(k4, (N, 2)), 0.1, 1.5)
    ang_t = ang_p + 0.05 * jax.random.normal(k3, (N, 1))
    targets = jnp.concatenate([centers_t, fovs_t, ang_t], axis=1)

    loss = spherical_iou_loss(preds, targets)
    jax.block_until_ready(loss)
    assert loss.shape == () and jnp.isfinite(loss)
    print("KERNEL_OK")
</pallas_src>

<mosaic_0001>
module attributes {stable_mosaic.version = 11 : i64} {
  func.func @_sph_iou_loss_kernel(%arg0: i32, %arg1: i32, %arg2: memref<1xi32, #tpu.memory_space<smem>>, %arg3: memref<8x32x128xf32, #tpu.memory_space<vmem>>, %arg4: memref<1x128xf32, #tpu.memory_space<vmem>>) attributes {dimension_semantics = [#tpu.dimension_semantics<parallel>, #tpu.dimension_semantics<arbitrary>], iteration_bounds = array<i64: 1, 1>, scalar_prefetch = 1 : i64, scratch_operands = 0 : i64, tpu.core_type = #tpu.core_type<tc>, window_params = [{transform_indices = @transform_0, window_bounds = array<i64: 8, 32, 128>}, {transform_indices = @transform_1, window_bounds = array<i64: 1, 128>}]} {
    %c0_i32 = arith.constant 0 : i32
    %0 = arith.cmpi eq, %arg1, %c0_i32 : i32
    %1 = arith.extui %0 : i1 to i32
    %c0_i32_0 = arith.constant 0 : i32
    %2 = arith.cmpi ne, %1, %c0_i32_0 : i32
    scf.if %2 {
      %cst_36 = arith.constant 0.000000e+00 : f32
      %87 = vector.broadcast %cst_36 : f32 to vector<1x128xf32>
      %c0_37 = arith.constant 0 : index
      %c0_38 = arith.constant 0 : index
      %88 = vector.load %arg4[%c0_37, %c0_38] : memref<1x128xf32, #tpu.memory_space<vmem>>, vector<1x128xf32>
      tpu.vector_store %arg4[%c0_37, %c0_38], %87 {strides = array<i32>} : memref<1x128xf32, #tpu.memory_space<vmem>>, vector<1x128xf32>,
    } else {
    }
    %c0 = arith.constant 0 : index
    %c0_1 = arith.constant 0 : index
    %c0_2 = arith.constant 0 : index
    %3 = vector.load %arg3[%c0, %c0_1, %c0_2] : memref<8x32x128xf32, #tpu.memory_space<vmem>>, vector<1x32x128xf32>
    %4 = vector.shape_cast %3 : vector<1x32x128xf32> to vector<32x128xf32>
    %c1 = arith.constant 1 : index
    %c0_3 = arith.constant 0 : index
    %c0_4 = arith.constant 0 : index
    %5 = vector.load %arg3[%c1, %c0_3, %c0_4] : memref<8x32x128xf32, #tpu.memory_space<vmem>>, vector<1x32x128xf32>
    %6 = vector.shape_cast %5 : vector<1x32x128xf32> to vector<32x128xf32>
    %c2 = arith.constant 2 : index
    %c0_5 = arith.constant 0 : index
    %c0_6 = arith.constant 0 : index
    %7 = vector.load %arg3[%c2, %c0_5, %c0_6] : memref<8x32x128xf32, #tpu.memory_space<vmem>>, vector<1x32x128xf32>
    %8 = vector.shape_cast %7 : vector<1x32x128xf32> to vector<32x128xf32>
    %c3 = arith.constant 3 : index
    %c0_7 = arith.constant 0 : index
    %c0_8 = arith.constant 0 : index
    %9 = vector.load %arg3[%c3, %c0_7, %c0_8] : memref<8x32x128xf32, #tpu.memory_space<vmem>>, vector<1x32x128xf32>
    %10 = vector.shape_cast %9 : vector<1x32x128xf32> to vector<32x128xf32>
    %c4 = arith.constant 4 : index
    %c0_9 = arith.constant 0 : index
    %c0_10 = arith.constant 0 : index
    %11 = vector.load %arg3[%c4, %c0_9, %c0_10] : memref<8x32x128xf32, #tpu.memory_space<vmem>>, vector<1x32x128xf32>
    %12 = vector.shape_cast %11 : vector<1x32x128xf32> to vector<32x128xf32>
    %c5 = arith.constant 5 : index
    %c0_11 = arith.constant 0 : index
    %c0_12 = arith.constant 0 : index
    %13 = vector.load %arg3[%c5, %c0_11, %c0_12] : memref<8x32x128xf32, #tpu.memory_space<vmem>>, vector<1x32x128xf32>
    %14 = vector.shape_cast %13 : vector<1x32x128xf32> to vector<32x128xf32>
    %c6 = arith.constant 6 : index
    %c0_13 = arith.constant 0 : index
    %c0_14 = arith.constant 0 : index
    %15 = vector.load %arg3[%c6, %c0_13, %c0_14] : memref<8x32x128xf32, #tpu.memory_space<vmem>>, vector<1x32x128xf32>
    %16 = vector.shape_cast %15 : vector<1x32x128xf32> to vector<32x128xf32>
    %c7 = arith.constant 7 : index
    %c0_15 = arith.constant 0 : index
    %c0_16 = arith.constant 0 : index
    %17 = vector.load %arg3[%c7, %c0_15, %c0_16] : memref<8x32x128xf32, #tpu.memory_space<vmem>>, vector<1x32x128xf32>
    %18 = vector.shape_cast %17 : vector<1x32x128xf32> to vector<32x128xf32>
    %19 = arith.subf %4, %12 : vector<32x128xf32>
    %20 = arith.addf %6, %14 : vector<32x128xf32>
    %cst = arith.constant 5.000000e-01 : f32
    %21 = vector.broadcast %cst : f32 to vector<32x128xf32>
    %22 = arith.mulf %21, %20 : vector<32x128xf32>
    %23 = math.cos %22 : vector<32x128xf32>
    %24 = arith.mulf %19, %23 : vector<32x128xf32>
    %25 = arith.subf %6, %14 : vector<32x128xf32>
    %cst_17 = arith.constant -5.000000e-01 : f32
    %26 = vector.broadcast %cst_17 : f32 to vector<32x128xf32>
    %27 = arith.mulf %26, %8 : vector<32x128xf32>
    %cst_18 = arith.constant 5.000000e-01 : f32
    %28 = vector.broadcast %cst_18 : f32 to vector<32x128xf32>
    %29 = arith.mulf %28, %16 : vector<32x128xf32>
    %30 = arith.subf %24, %29 : vector<32x128xf32>
    %31 = arith.maximumf %27, %30 : vector<32x128xf32>
    %cst_19 = arith.constant 5.000000e-01 : f32
    %32 = vector.broadcast %cst_19 : f32 to vector<32x128xf32>
    %33 = arith.mulf %32, %8 : vector<32x128xf32>
    %cst_20 = arith.constant 5.000000e-01 : f32
    %34 = vector.broadcast %cst_20 : f32 to vector<32x128xf32>
    %35 = arith.mulf %34, %16 : vector<32x128xf32>
    %36 = arith.addf %24, %35 : vector<32x128xf32>
    %37 = arith.minimumf %33, %36 : vector<32x128xf32>
    %cst_21 = arith.constant -5.000000e-01 : f32
    %38 = vector.broadcast %cst_21 : f32 to vector<32x128xf32>
    %39 = arith.mulf %38, %10 : vector<32x128xf32>
    %cst_22 = arith.constant 5.000000e-01 : f32
    %40 = vector.broadcast %cst_22 : f32 to vector<32x128xf32>
    %41 = arith.mulf %40, %18 : vector<32x128xf32>
    %42 = arith.subf %25, %41 : vector<32x128xf32>
    %43 = arith.maximumf %39, %42 : vector<32x128xf32>
    %cst_23 = arith.constant 5.000000e-01 : f32
    %44 = vector.broadcast %cst_23 : f32 to vector<32x128xf32>
    %45 = arith.mulf %44, %10 : vector<32x128xf32>
    %cst_24 = arith.constant 5.000000e-01 : f32
    %46 = vector.broadcast %cst_24 : f32 to vector<32x128xf32>
    %47 = arith.mulf %46, %18 : vector<32x128xf32>
    %48 = arith.addf %25, %47 : vector<32x128xf32>
    %49 = arith.minimumf %45, %48 : vector<32x128xf32>
    %50 = arith.subf %37, %31 : vector<32x128xf32>
    %cst_25 = arith.constant 0.000000e+00 : f32
    %51 = vector.broadcast %cst_25 : f32 to vector<32x128xf32>
    %52 = arith.maximumf %50, %51 : vector<32x128xf32>
    %53 = arith.subf %49, %43 : vector<32x128xf32>
    %cst_26 = arith.constant 0.000000e+00 : f32
    %54 = vector.broadcast %cst_26 : f32 to vector<32x128xf32>
    %55 = arith.maximumf %53, %54 : vector<32x128xf32>
    %56 = arith.mulf %52, %55 : vector<32x128xf32>
    %57 = arith.mulf %8, %10 : vector<32x128xf32>
    %58 = arith.mulf %16, %18 : vector<32x128xf32>
    %59 = arith.addf %57, %58 : vector<32x128xf32>
    %60 = arith.subf %59, %56 : vector<32x128xf32>
    %cst_27 = arith.constant 9.99999993E-9 : f32
    %61 = vector.broadcast %cst_27 : f32 to vector<32x128xf32>
    %62 = arith.addf %60, %61 : vector<32x128xf32>
    %63 = tpu.reciprocal %62 {approx = true} : vector<32x128xf32> -> vector<32x128xf32>
    %64 = arith.mulf %56, %63 : vector<32x128xf32>
    %c1_i32 = arith.constant 1 : i32
    %65 = arith.muli %arg0, %c1_i32 : i32
    %66 = arith.addi %65, %arg1 : i32
    %67 = tpu.iota {dimensions = array<i32: 0>} : vector<32x128xi32>
    %68 = tpu.iota {dimensions = array<i32: 1>} : vector<32x128xi32>
    %c32_i32 = arith.constant 32 : i32
    %69 = arith.muli %66, %c32_i32 : i32
    %70 = vector.broadcast %69 : i32 to vector<32x128xi32>
    %71 = arith.addi %70, %67 : vector<32x128xi32>
    %c128_i32 = arith.constant 128 : i32
    %72 = vector.broadcast %c128_i32 : i32 to vector<32x128xi32>
    %73 = arith.muli %71, %72 : vector<32x128xi32>
    %74 = arith.addi %73, %68 : vector<32x128xi32>
    %c0_28 = arith.constant 0 : index
    %75 = memref.load %arg2[%c0_28] : memref<1xi32, #tpu.memory_space<smem>>
    %76 = vector.broadcast %75 : i32 to vector<32x128xi32>
    %77 = arith.cmpi slt, %74, %76 : vector<32x128xi32>
    %cst_29 = arith.constant 1.000000e+00 : f32
    %78 = vector.broadcast %cst_29 : f32 to vector<32x128xf32>
    %79 = arith.subf %78, %64 : vector<32x128xf32>
    %cst_30 = arith.constant 0.000000e+00 : f32
    %80 = vector.broadcast %cst_30 : f32 to vector<32x128xf32>
    %81 = arith.select %77, %79, %80 : vector<32x128xi1>, vector<32x128xf32>
    %c0_31 = arith.constant 0 : index
    %c0_32 = arith.constant 0 : index
    %82 = vector.load %arg4[%c0_31, %c0_32] : memref<1x128xf32, #tpu.memory_space<vmem>>, vector<1x128xf32>
    %cst_33 = arith.constant dense<0.000000e+00> : vector<128xf32>
    %83 = vector.multi_reduction <add>, %81, %cst_33 [0] : vector<32x128xf32> to vector<128xf32>
    %84 = vector.shape_cast %83 : vector<128xf32> to vector<1x128xf32>
    %85 = arith.addf %82, %84 : vector<1x128xf32>
    %c0_34 = arith.constant 0 : index
    %c0_35 = arith.constant 0 : index
    %86 = vector.load %arg4[%c0_34, %c0_35] : memref<1x128xf32, #tpu.memory_space<vmem>>, vector<1x128xf32>
    tpu.vector_store %arg4[%c0_34, %c0_35], %85 {strides = array<i32>} : memref<1x128xf32, #tpu.memory_space<vmem>>, vector<1x128xf32>,
    return
  }
  func.func @transform_0(%arg0: i32, %arg1: i32, %arg2: memref<1xi32, #tpu.memory_space<smem>>) -> (i32, i32, i32) {
    %c1_i32 = arith.constant 1 : i32
    %0 = arith.muli %arg0, %c1_i32 : i32
    %1 = arith.addi %0, %arg1 : i32
    %c0_i32 = arith.constant 0 : i32
    %c0_i32_0 = arith.constant 0 : i32
    %c0_i32_1 = arith.constant 0 : i32
    return %c0_i32, %1, %c0_i32_0 : i32, i32, i32
  }
  func.func @transform_1(%arg0: i32, %arg1: i32, %arg2: memref<1xi32, #tpu.memory_space<smem>>) -> (i32, i32) {
    %c0_i32 = arith.constant 0 : i32
    %c0_i32_0 = arith.constant 0 : i32
    return %arg0, %c0_i32 : i32, i32
  }
}

</mosaic_0001>

<llo_original>
// kernel: tpu_custom_call.1
$region0: #{tpu_custom_call.1}
  #allocation0 [shape = 'u32[]', space=smem, size = 0x4, offset = 0x4, fixed_abs, tag = 'smem constant byte address 0x4 - core index']
  #allocation1 [shape = 'u32[144,128]{1,0:T(1,128)}', space=vmem, size = 0x12000, scoped, tag = 'internal scratch']
  #allocation2 [shape = 's32[1]{0}', space=sflag, size = 0x4, scoped, tag = 'scoped memory for tpu_custom_call.1']
  #allocation3 [shape = 's32[1]{0:T(128)S(6)}', space=smem, size = 0x200, scoped, tag = 'prefetched SMEM operand 0']
  %s0 = inlined_call_operand.<no memory space> [shape: s32[1], index: 0, kind: input, shape index: {}]
  %s1 = inlined_call_operand.hbm [shape: f32[8,32,128], index: 1, kind: input, shape index: {}]
  %s2 = inlined_call_operand.hbm [shape: f32[1,128], index: 2, kind: output, shape index: {}]
  %s3 = sld [smem:[#allocation0]]
  $region22: #{tpu_custom_call.1} parent=0
    _
  %s5 = ssub.s32 1, %s3
  %s6 = scalar_select 0, %s5, %s3
  %7 = sst [smem:[#allocation3]] %s0
  $region1: #{tpu_custom_call.1} parent=0
    #allocation4 [shape = 'u8[131072]{0}', space=vmem, size = 0x20000, scoped, tag = 'input window, operand 1, single buffered']
    #allocation5 [shape = 's32[1]{0}', space=sflag, size = 0x4, scoped, tag = 'scoped memory for tpu_custom_call.1']
    #allocation6 [shape = 's32[1]{0}', space=sflag, size = 0x4, scoped, tag = 'scoped memory for tpu_custom_call.1']
    #allocation7 [shape = 'u8[512]{0}', space=vmem, size = 0x400, scoped, tag = 'output window, operand 0, single buffered']
    %8 = vsyncpa [#allocation5], 0
    %9 = vsyncpa [#allocation6], 0
    // Predicated region
    $region2: #{tpu_custom_call.1} parent=1 // pred_check
      _
    $region3: #{tpu_custom_call.1} parent=1 // pred_check_branch
      %11 = sbr.rel (0) target = $region5
    $region4: #{tpu_custom_call.1} parent=1 // pred_region
      %s12 = sadd.s32 0, 0
      %s13 = smul.u32 4, %s12
      %s15 = ssub.s32 4096, 4096
      %16 = vsyncadd [#allocation5], %s15
      %s17 = smul.addr %s13, 128
      %s18 = scalar_lea.hbm %s1, %s17
      %s19 = sshll.u32 [#allocation4], 4
      %s20 = int_to_ptr.vmem [resolvable:$true] %s19
      %25 = dma.hbm_to_vmem [thread:$0]  %s18, 4096, %s20, [#allocation5], 128, 128, 8
    $region5: #{tpu_custom_call.1} parent=1 // pred_fallthru
      _
    // Predicated region
    $region6: #{tpu_custom_call.1} parent=1 // pred_check
      _
    $region7: #{tpu_custom_call.1} parent=1 // pred_check_branch
      %27 = sbr.rel (0) target = $region9
    $region8: #{tpu_custom_call.1} parent=1 // pred_region
      %28 = dma.done [#allocation5], 4096
    $region9: #{tpu_custom_call.1} parent=1 // pred_fallthru
      _
    %s29 = sadd.s32 0, 0
    %s30 = smul.u32 4, %s29
    %p31 = scmp.eq.s32.totalorder 0, 0
    // Predicated region
    $region10: #{tpu_custom_call.1} parent=1 // pred_check
      %p32 = pneg %p31
    $region11: #{tpu_custom_call.1} parent=1 // pred_check_branch
      %34 = sbr.rel (%p32) target = $region13
    $region12: #{tpu_custom_call.1} parent=1 // pred_region
      %35 = vst [vmem:[#allocation7] sm:$0x1] 0.0
    $region13: #{tpu_custom_call.1} parent=1 // pred_fallthru
      _
    %v36 = vld [vmem:[#allocation4] sm:$0xff]
    %v37 = vld [vmem:[#allocation4 + $0x8] sm:$0xff]
    %v38 = vld [vmem:[#allocation4 + $0x10] sm:$0xff]
    %v39 = vld [vmem:[#allocation4 + $0x18] sm:$0xff]
    %s40 = scalar_lea.vmem [#allocation4], 32
    %v41 = vld [vmem:[%s40] sm:$0xff]
    %v42 = vld [vmem:[%s40 + $0x8] sm:$0xff]
    %v43 = vld [vmem:[%s40 + $0x10] sm:$0xff]
    %v44 = vld [vmem:[%s40 + $0x18] sm:$0xff]
    %s45 = scalar_lea.vmem [#allocation4], 64
    %v46 = vld [vmem:[%s45] sm:$0xff]
    %v47 = vld [vmem:[%s45 + $0x8] sm:$0xff]
    %v48 = vld [vmem:[%s45 + $0x10] sm:$0xff]
    %v49 = vld [vmem:[%s45 + $0x18] sm:$0xff]
    %s50 = scalar_lea.vmem [#allocation4], 96
    %v51 = vld [vmem:[%s50] sm:$0xff]
    %v52 = vld [vmem:[%s50 + $0x8] sm:$0xff]
    %v53 = vld [vmem:[%s50 + $0x10] sm:$0xff]
    %v54 = vld [vmem:[%s50 + $0x18] sm:$0xff]
    %s55 = scalar_lea.vmem [#allocation4], 128
    %v56 = vld [vmem:[%s55] sm:$0xff]
    %v57 = vld [vmem:[%s55 + $0x8] sm:$0xff]
    %v58 = vld [vmem:[%s55 + $0x10] sm:$0xff]
    %v59 = vld [vmem:[%s55 + $0x18] sm:$0xff]
    %s60 = scalar_lea.vmem [#allocation4], 160
    %v61 = vld [vmem:[%s60] sm:$0xff]
    %v62 = vld [vmem:[%s60 + $0x8] sm:$0xff]
    %v63 = vld [vmem:[%s60 + $0x10] sm:$0xff]
    %v64 = vld [vmem:[%s60 + $0x18] sm:$0xff]
    %s65 = scalar_lea.vmem [#allocation4], 192
    %v66 = vld [vmem:[%s65] sm:$0xff]
    %v67 = vld [vmem:[%s65 + $0x8] sm:$0xff]
    %v68 = vld [vmem:[%s65 + $0x10] sm:$0xff]
    %v69 = vld [vmem:[%s65 + $0x18] sm:$0xff]
    %s70 = scalar_lea.vmem [#allocation4], 224
    %v71 = vld [vmem:[%s70] sm:$0xff]
    %v72 = vld [vmem:[%s70 + $0x8] sm:$0xff]
    %v73 = vld [vmem:[%s70 + $0x10] sm:$0xff]
    %v74 = vld [vmem:[%s70 + $0x18] sm:$0xff]
    %v75 = vsub.f32 %v36, %v56
    %v76 = vsub.f32 %v37, %v57
    %v77 = vsub.f32 %v38, %v58
    %v78 = vsub.f32 %v39, %v59
    %v79 = vadd.f32 %v41, %v61
    %v80 = vadd.f32 %v42, %v62
    %v81 = vadd.f32 %v43, %v63
    %v82 = vadd.f32 %v44, %v64
    %v83 = vmul.f32 %v79, 0.5
    %v84 = vmul.f32 %v80, 0.5
    %v85 = vmul.f32 %v81, 0.5
    %v86 = vmul.f32 %v82, 0.5
    %v87 = vand.u32 2147483647, %v83
    %vm88 = vcmp.le.f32.partialorder %v87, 0.7853982
    %vm89 = vcmp.lt.s32.totalorder %v83, 0
    %v90 = vand.u32 %v83, 2139095040
    %v91 = vshrl.u32 %v90, 23
    %v92 = vsub.s32 %v91, 127
    %v93 = vand.u32 2147483647, %v83
    %v94 = vand.u32 %v93, 8388607
    %v95 = vor.u32 %v94, 8388608
    %v96 = vsub.s32 0, %v95
    %v97 = vadd.s32 %v92, 1
    %vm98 = vcmp.gt.s32.totalorder %v97, 0
    %v99 = vsel %vm98, %v97, 0
    %v100 = vshrl.u32 %v99, 5
    %v101 = vand.u32 %v99, 31
    %v102 = vsub.s32 32, %v101
    %v103 = vshrl.u32 683565275, %v102
    %v104 = vshll.u32 683565275, %v101
    %v105 = vshrl.u32 2475754826, %v102
    %v106 = vor.u32 %v104, %v105
    %v107 = vshll.u32 2475754826, %v101
    %v108 = vshrl.u32 2131351028, %v102
    %v109 = vor.u32 %v107, %v108
    %v110 = vshll.u32 2131351028, %v101
    %v111 = vshrl.u32 2102212464, %v102
    %v112 = vor.u32 %v110, %v111
    %v113 = vshll.u32 2102212464, %v101
    %v114 = vshrl.u32 920167782, %v102
    %v115 = vor.u32 %v113, %v114
    %v116 = vshll.u32 920167782, %v101
    %v117 = vshrl.u32 1326507024, %v102
    %v118 = vor.u32 %v116, %v117
    %vm119 = vcmp.lt.s32.totalorder %v100, 1
    %vm120 = vcmp.lt.s32.totalorder %v100, 2
    %vm121 = vcmp.lt.s32.totalorder %v100, 3
    %vm122 = vcmp.lt.s32.totalorder %v100, 4
    %v123 = vsel %vm119, %v103, %v106
    %v124 = vsel %vm122, %v112, 2102212464
    %v125 = vsel %vm121, %v109, %v124
    %v126 = vsel %vm120, %v123, %v125
    %v127 = vsel %vm119, %v106, %v109
    %v128 = vsel %vm122, %v115, 920167782
    %v129 = vsel %vm121, %v112, %v128
    %v130 = vsel %vm120, %v127, %v129
    %v131 = vsel %vm119, %v109, %v112
    %v132 = vsel %vm122, %v118, 1326507024
    %v133 = vsel %vm121, %v115, %v132
    %v134 = vsel %vm120, %v131, %v133
    %v135 = vshll.u32 %v95, 8
    %v136 = vmul.u32.u64.compose %v135, %v134
    %v137 = vextract.low.u32 %v136
    %v138 = vextract.high.u32 %v136
    %v139 = vmul.u32.u64.compose %v135, %v130
    %v140 = vextract.low.u32 %v139
    %v141 = vextract.high.u32 %v139
    %v142 = vmul.u32 %v135, %v126
    %v143 = vadd.s32 %v138, %v140
    %vm144 = vc.u32 %v138, %v140
    %v145 = vadd.s32 %v141, 1
    %v146 = vsel %vm144, %v145, %v141
    %v147 = vadd.s32 %v142, %v146
    %v148 = vadd.s32 %v147, 536870912
    %v149 = vshrl.u32 %v148, 30
    %v150 = vshll.u32 %v149, 30
    %v151 = vsub.s32 %v147, %v150
    %vm152 = vcmp.lt.s32.totalorder %v151, 0
    %v153 = vsub.s32 0, %v151
    %v154 = vsel %vm152, %v153, %v151
    %v155 = vclz %v154
    %v156 = vsub.s32 %v155, 2
    %vm157 = vcmp.gt.s32.totalorder 0, %v156
    %v158 = vsel %vm157, 0, %v156
    %v159 = vsub.s32 32, %v158
    %v160 = vshll.u32 %v151, %v158
    %v161 = vshrl.u32 %v143, %v159
    %v162 = vor.u32 %v160, %v161
    %v163 = vsub.s32 4294967266, %v158
    %v164 = vadd.s32 %v163, 127
    %v165 = vshll.u32 %v164, 23
    %v166 = vor.u32 4788187, %v165
    %v167 = vand.u32 2147483647, %v166
    %v169 = vcvt.s32.f32 %v162
    %v170 = vmul.f32 %v169, %v167
    %v171 = vxor.u32 %v170, 2147483648
    %v172 = vsel %vm89, %v171, %v170
    %v173 = vsub.s32 4, %v149
    %v174 = vsel %vm89, %v173, %v149
    %v175 = vsel %vm88, %v83, %v172
    %v176 = vsel %vm88, 0, %v174
    %v177 = vcosq.f32.pop %v175
    %v178 = vsinq.f32.pop %v175
    %vm179 = vweird.f32 %v83
    %v180 = vand.u32 %v176, 3
    %vm181 = vcmp.lt.s32.totalorder %v180, 2
    %vm182 = vcmp.eq.s32.totalorder %v180, 0
    %v183 = vxor.u32 %v178, 2147483648
    %v184 = vsel %vm182, %v177, %v183
    %vm185 = vcmp.eq.s32.totalorder %v180, 2
    %v186 = vxor.u32 %v177, 2147483648
    %v187 = vsel %vm185, %v186, %v178
    %v188 = vsel %vm181, %v184, %v187
    %v189 = vsel %vm179, nan, %v188
    %v190 = vand.u32 2147483647, %v84
    %vm191 = vcmp.le.f32.partialorder %v190, 0.7853982
    %vm192 = vcmp.lt.s32.totalorder %v84, 0
    %v193 = vand.u32 %v84, 2139095040
    %v194 = vshrl.u32 %v193, 23
    %v195 = vsub.s32 %v194, 127
    %v196 = vand.u32 2147483647, %v84
    %v197 = vand.u32 %v196, 8388607
    %v198 = vor.u32 %v197, 8388608
    %v199 = vsub.s32 0, %v198
    %v200 = vadd.s32 %v195, 1
    %vm201 = vcmp.gt.s32.totalorder %v200, 0
    %v202 = vsel %vm201, %v200, 0
    %v203 = vshrl.u32 %v202, 5
    %v204 = vand.u32 %v202, 31
    %v205 = vsub.s32 32, %v204
    %v206 = vshrl.u32 683565275, %v205
    %v207 = vshll.u32 683565275, %v204
    %v208 = vshrl.u32 2475754826, %v205
    %v209 = vor.u32 %v207, %v208
    %v210 = vshll.u32 2475754826, %v204
    %v211 = vshrl.u32 2131351028, %v205
    %v212 = vor.u32 %v210, %v211
    %v213 = vshll.u32 2131351028, %v204
    %v214 = vshrl.u32 2102212464, %v205
    %v215 = vor.u32 %v213, %v214
    %v216 = vshll.u32 2102212464, %v204
    %v217 = vshrl.u32 920167782, %v205
    %v218 = vor.u32 %v216, %v217
    %v219 = vshll.u32 920167782, %v204
    %v220 = vshrl.u32 1326507024, %v205
    %v221 = vor.u32 %v219, %v220
    %vm222 = vcmp.lt.s32.totalorder %v203, 1
    %vm223 = vcmp.lt.s32.totalorder %v203, 2
    %vm224 = vcmp.lt.s32.totalorder %v203, 3
    %vm225 = vcmp.lt.s32.totalorder %v203, 4
    %v226 = vsel %vm222, %v206, %v209
    %v227 = vsel %vm225, %v215, 2102212464
    %v228 = vsel %vm224, %v212, %v227
    %v229 = vsel %vm223, %v226, %v228
    %v230 = vsel %vm222, %v209, %v212
    %v231 = vsel %vm225, %v218, 920167782
    %v232 = vsel %vm224, %v215, %v231
    %v233 = vsel %vm223, %v230, %v232
    %v234 = vsel %vm222, %v212, %v215
    %v235 = vsel %vm225, %v221, 1326507024
    %v236 = vsel %vm224, %v218, %v235
    %v237 = vsel %vm223, %v234, %v236
    %v238 = vshll.u32 %v198, 8
    %v239 = vmul.u32.u64.compose %v238, %v237
    %v240 = vextract.low.u32 %v239
    %v241 = vextract.high.u32 %v239
    %v242 = vmul.u32.u64.compose %v238, %v233
    %v243 = vextract.low.u32 %v242
    %v244 = vextract.high.u32 %v242
    %v245 = vmul.u32 %v238, %v229
    %v246 = vadd.s32 %v241, %v243
    %vm247 = vc.u32 %v241, %v243
    %v248 = vadd.s32 %v244, 1
    %v249 = vsel %vm247, %v248, %v244
    %v250 = vadd.s32 %v245, %v249
    %v251 = vadd.s32 %v250, 536870912
    %v252 = vshrl.u32 %v251, 30
    %v253 = vshll.u32 %v252, 30
    %v254 = vsub.s32 %v250, %v253
    %vm255 = vcmp.lt.s32.totalorder %v254, 0
    %v256 = vsub.s32 0, %v254
    %v257 = vsel %vm255, %v256, %v254
    %v258 = vclz %v257
    %v259 = vsub.s32 %v258, 2
    %vm260 = vcmp.gt.s32.totalorder 0, %v259
    %v261 = vsel %vm260, 0, %v259
    %v262 = vsub.s32 32, %v261
    %v263 = vshll.u32 %v254, %v261
    %v264 = vshrl.u32 %v246, %v262
    %v265 = vor.u32 %v263, %v264
    %v266 = vsub.s32 4294967266, %v261
    %v267 = vadd.s32 %v266, 127
    %v268 = vshll.u32 %v267, 23
    %v269 = vor.u32 4788187, %v268
    %v270 = vand.u32 2147483647, %v269
    %v272 = vcvt.s32.f32 %v265
    %v273 = vmul.f32 %v272, %v270
    %v274 = vxor.u32 %v273, 2147483648
    %v275 = vsel %vm192, %v274, %v273
    %v276 = vsub.s32 4, %v252
    %v277 = vsel %vm192, %v276, %v252
    %v278 = vsel %vm191, %v84, %v275
    %v279 = vsel %vm191, 0, %v277
    %v280 = vcosq.f32.pop %v278
    %v281 = vsinq.f32.pop %v278
    %vm282 = vweird.f32 %v84
    %v283 = vand.u32 %v279, 3
    %vm284 = vcmp.lt.s32.totalorder %v283, 2
    %vm285 = vcmp.eq.s32.totalorder %v283, 0
    %v286 = vxor.u32 %v281, 2147483648
    %v287 = vsel %vm285, %v280, %v286
    %vm288 = vcmp.eq.s32.totalorder %v283, 2
    %v289 = vxor.u32 %v280, 2147483648
    %v290 = vsel %vm288, %v289, %v281
    %v291 = vsel %vm284, %v287, %v290
    %v292 = vsel %vm282, nan, %v291
    %v293 = vand.u32 2147483647, %v85
    %vm294 = vcmp.le.f32.partialorder %v293, 0.7853982
    %vm295 = vcmp.lt.s32.totalorder %v85, 0
    %v296 = vand.u32 %v85, 2139095040
    %v297 = vshrl.u32 %v296, 23
    %v298 = vsub.s32 %v297, 127
    %v299 = vand.u32 2147483647, %v85
    %v300 = vand.u32 %v299, 8388607
    %v301 = vor.u32 %v300, 8388608
    %v302 = vsub.s32 0, %v301
    %v303 = vadd.s32 %v298, 1
    %vm304 = vcmp.gt.s32.totalorder %v303, 0
    %v305 = vsel %vm304, %v303, 0
    %v306 = vshrl.u32 %v305, 5
    %v307 = vand.u32 %v305, 31
    %v308 = vsub.s32 32, %v307
    %v309 = vshrl.u32 683565275, %v308
    %v310 = vshll.u32 683565275, %v307
    %v311 = vshrl.u32 2475754826, %v308
    %v312 = vor.u32 %v310, %v311
    %v313 = vshll.u32 2475754826, %v307
    %v314 = vshrl.u32 2131351028, %v308
    %v315 = vor.u32 %v313, %v314
    %v316 = vshll.u32 2131351028, %v307
    %v317 = vshrl.u32 2102212464, %v308
    %v318 = vor.u32 %v316, %v317
    %v319 = vshll.u32 2102212464, %v307
    %v320 = vshrl.u32 920167782, %v308
    %v321 = vor.u32 %v319, %v320
    %v322 = vshll.u32 920167782, %v307
    %v323 = vshrl.u32 1326507024, %v308
    %v324 = vor.u32 %v322, %v323
    %vm325 = vcmp.lt.s32.totalorder %v306, 1
    %vm326 = vcmp.lt.s32.totalorder %v306, 2
    %vm327 = vcmp.lt.s32.totalorder %v306, 3
    %vm328 = vcmp.lt.s32.totalorder %v306, 4
    %v329 = vsel %vm325, %v309, %v312
    %v330 = vsel %vm328, %v318, 2102212464
    %v331 = vsel %vm327, %v315, %v330
    %v332 = vsel %vm326, %v329, %v331
    %v333 = vsel %vm325, %v312, %v315
    %v334 = vsel %vm328, %v321, 920167782
    %v335 = vsel %vm327, %v318, %v334
    %v336 = vsel %vm326, %v333, %v335
    %v337 = vsel %vm325, %v315, %v318
    %v338 = vsel %vm328, %v324, 1326507024
    %v339 = vsel %vm327, %v321, %v338
    %v340 = vsel %vm326, %v337, %v339
    %v341 = vshll.u32 %v301, 8
    %v342 = vmul.u32.u64.compose %v341, %v340
    %v343 = vextract.low.u32 %v342
    %v344 = vextract.high.u32 %v342
    %v345 = vmul.u32.u64.compose %v341, %v336
    %v346 = vextract.low.u32 %v345
    %v347 = vextract.high.u32 %v345
    %v348 = vmul.u32 %v341, %v332
    %v349 = vadd.s32 %v344, %v346
    %vm350 = vc.u32 %v344, %v346
    %v351 = vadd.s32 %v347, 1
    %v352 = vsel %vm350, %v351, %v347
    %v353 = vadd.s32 %v348, %v352
    %v354 = vadd.s32 %v353, 536870912
    %v355 = vshrl.u32 %v354, 30
    %v356 = vshll.u32 %v355, 30
    %v357 = vsub.s32 %v353, %v356
    %vm358 = vcmp.lt.s32.totalorder %v357, 0
    %v359 = vsub.s32 0, %v357
    %v360 = vsel %vm358, %v359, %v357
    %v361 = vclz %v360
    %v362 = vsub.s32 %v361, 2
    %vm363 = vcmp.gt.s32.totalorder 0, %v362
    %v364 = vsel %vm363, 0, %v362
    %v365 = vsub.s32 32, %v364
    %v366 = vshll.u32 %v357, %v364
    %v367 = vshrl.u32 %v349, %v365
    %v368 = vor.u32 %v366, %v367
    %v369 = vsub.s32 4294967266, %v364
    %v370 = vadd.s32 %v369, 127
    %v371 = vshll.u32 %v370, 23
    %v372 = vor.u32 4788187, %v371
    %v373 = vand.u32 2147483647, %v372
    %v375 = vcvt.s32.f32 %v368
    %v376 = vmul.f32 %v375, %v373
    %v377 = vxor.u32 %v376, 2147483648
    %v378 = vsel %vm295, %v377, %v376
    %v379 = vsub.s32 4, %v355
    %v380 = vsel %vm295, %v379, %v355
    %v381 = vsel %vm294, %v85, %v378
    %v382 = vsel %vm294, 0, %v380
    %v383 = vcosq.f32.pop %v381
    %v384 = vsinq.f32.pop %v381
    %vm385 = vweird.f32 %v85
    %v386 = vand.u32 %v382, 3
    %vm387 = vcmp.lt.s32.totalorder %v386, 2
    %vm388 = vcmp.eq.s32.totalorder %v386, 0
    %v389 = vxor.u32 %v384, 2147483648
    %v390 = vsel %vm388, %v383, %v389
    %vm391 = vcmp.eq.s32.totalorder %v386, 2
    %v392 = vxor.u32 %v383, 2147483648
    %v393 = vsel %vm391, %v392, %v384
    %v394 = vsel %vm387, %v390, %v393
    %v395 = vsel %vm385, nan, %v394
    %v396 = vand.u32 2147483647, %v86
    %vm397 = vcmp.le.f32.partialorder %v396, 0.7853982
    %vm398 = vcmp.lt.s32.totalorder %v86, 0
    %v399 = vand.u32 %v86, 2139095040
    %v400 = vshrl.u32 %v399, 23
    %v401 = vsub.s32 %v400, 127
    %v402 = vand.u32 2147483647, %v86
    %v403 = vand.u32 %v402, 8388607
    %v404 = vor.u32 %v403, 8388608
    %v405 = vsub.s32 0, %v404
    %v406 = vadd.s32 %v401, 1
    %vm407 = vcmp.gt.s32.totalorder %v406, 0
    %v408 = vsel %vm407, %v406, 0
    %v409 = vshrl.u32 %v408, 5
    %v410 = vand.u32 %v408, 31
    %v411 = vsub.s32 32, %v410
    %v412 = vshrl.u32 683565275, %v411
    %v413 = vshll.u32 683565275, %v410
    %v414 = vshrl.u32 2475754826, %v411
    %v415 = vor.u32 %v413, %v414
    %v416 = vshll.u32 2475754826, %v410
    %v417 = vshrl.u32 2131351028, %v411
    %v418 = vor.u32 %v416, %v417
    %v419 = vshll.u32 2131351028, %v410
    %v420 = vshrl.u32 2102212464, %v411
    %v421 = vor.u32 %v419, %v420
    %v422 = vshll.u32 2102212464, %v410
    %v423 = vshrl.u32 920167782, %v411
    %v424 = vor.u32 %v422, %v423
    %v425 = vshll.u32 920167782, %v410
    %v426 = vshrl.u32 1326507024, %v411
    %v427 = vor.u32 %v425, %v426
    %vm428 = vcmp.lt.s32.totalorder %v409, 1
    %vm429 = vcmp.lt.s32.totalorder %v409, 2
    %vm430 = vcmp.lt.s32.totalorder %v409, 3
    %vm431 = vcmp.lt.s32.totalorder %v409, 4
    %v432 = vsel %vm428, %v412, %v415
    %v433 = vsel %vm431, %v421, 2102212464
    %v434 = vsel %vm430, %v418, %v433
    %v435 = vsel %vm429, %v432, %v434
    %v436 = vsel %vm428, %v415, %v418
    %v437 = vsel %vm431, %v424, 920167782
    %v438 = vsel %vm430, %v421, %v437
    %v439 = vsel %vm429, %v436, %v438
    %v440 = vsel %vm428, %v418, %v421
    %v441 = vsel %vm431, %v427, 1326507024
    %v442 = vsel %vm430, %v424, %v441
    %v443 = vsel %vm429, %v440, %v442
    %v444 = vshll.u32 %v404, 8
    %v445 = vmul.u32.u64.compose %v444, %v443
    %v446 = vextract.low.u32 %v445
    %v447 = vextract.high.u32 %v445
    %v448 = vmul.u32.u64.compose %v444, %v439
    %v449 = vextract.low.u32 %v448
    %v450 = vextract.high.u32 %v448
    %v451 = vmul.u32 %v444, %v435
    %v452 = vadd.s32 %v447, %v449
    %vm453 = vc.u32 %v447, %v449
    %v454 = vadd.s32 %v450, 1
    %v455 = vsel %vm453, %v454, %v450
    %v456 = vadd.s32 %v451, %v455
    %v457 = vadd.s32 %v456, 536870912
    %v458 = vshrl.u32 %v457, 30
    %v459 = vshll.u32 %v458, 30
    %v460 = vsub.s32 %v456, %v459
    %vm461 = vcmp.lt.s32.totalorder %v460, 0
    %v462 = vsub.s32 0, %v460
    %v463 = vsel %vm461, %v462, %v460
    %v464 = vclz %v463
    %v465 = vsub.s32 %v464, 2
    %vm466 = vcmp.gt.s32.totalorder 0, %v465
    %v467 = vsel %vm466, 0, %v465
    %v468 = vsub.s32 32, %v467
    %v469 = vshll.u32 %v460, %v467
    %v470 = vshrl.u32 %v452, %v468
    %v471 = vor.u32 %v469, %v470
    %v472 = vsub.s32 4294967266, %v467
    %v473 = vadd.s32 %v472, 127
    %v474 = vshll.u32 %v473, 23
    %v475 = vor.u32 4788187, %v474
    %v476 = vand.u32 2147483647, %v475
    %v478 = vcvt.s32.f32 %v471
    %v479 = vmul.f32 %v478, %v476
    %v480 = vxor.u32 %v479, 2147483648
    %v481 = vsel %vm398, %v480, %v479
    %v482 = vsub.s32 4, %v458
    %v483 = vsel %vm398, %v482, %v458
    %v484 = vsel %vm397, %v86, %v481
    %v485 = vsel %vm397, 0, %v483
    %v486 = vcosq.f32.pop %v484
    %v487 = vsinq.f32.pop %v484
    %vm488 = vweird.f32 %v86
    %v489 = vand.u32 %v485, 3
    %vm490 = vcmp.lt.s32.totalorder %v489, 2
    %vm491 = vcmp.eq.s32.totalorder %v489, 0
    %v492 = vxor.u32 %v487, 2147483648
    %v493 = vsel %vm491, %v486, %v492
    %vm494 = vcmp.eq.s32.totalorder %v489, 2
    %v495 = vxor.u32 %v486, 2147483648
    %v496 = vsel %vm494, %v495, %v487
    %v497 = vsel %vm490, %v493, %v496
    %v498 = vsel %vm488, nan, %v497
    %v499 = vmul.f32 %v75, %v189
    %v500 = vmul.f32 %v76, %v292
    %v501 = vmul.f32 %v77, %v395
    %v502 = vmul.f32 %v78, %v498
    %v503 = vsub.f32 %v41, %v61
    %v504 = vsub.f32 %v42, %v62
    %v505 = vsub.f32 %v43, %v63
    %v506 = vsub.f32 %v44, %v64
    %v507 = vmul.f32 %v46, -0.5
    %v508 = vmul.f32 %v47, -0.5
    %v509 = vmul.f32 %v48, -0.5
    %v510 = vmul.f32 %v49, -0.5
    %v511 = vmul.f32 %v66, 0.5
    %v512 = vmul.f32 %v67, 0.5
    %v513 = vmul.f32 %v68, 0.5
    %v514 = vmul.f32 %v69, 0.5
    %v515 = vsub.f32 %v499, %v511
    %v516 = vsub.f32 %v500, %v512
    %v517 = vsub.f32 %v501, %v513
    %v518 = vsub.f32 %v502, %v514
    %v519 = vmax.f32 %v507, %v515
    %v520 = vmax.f32 %v508, %v516
    %v521 = vmax.f32 %v509, %v517
    %v522 = vmax.f32 %v510, %v518
    %v523 = vmul.f32 %v46, 0.5
    %v524 = vmul.f32 %v47, 0.5
    %v525 = vmul.f32 %v48, 0.5
    %v526 = vmul.f32 %v49, 0.5
    %v527 = vadd.f32 %v499, %v511
    %v528 = vadd.f32 %v500, %v512
    %v529 = vadd.f32 %v501, %v513
    %v530 = vadd.f32 %v502, %v514
    %v531 = vmin.f32 %v523, %v527
    %v532 = vmin.f32 %v524, %v528
    %v533 = vmin.f32 %v525, %v529
    %v534 = vmin.f32 %v526, %v530
    %v535 = vmul.f32 %v51, -0.5
    %v536 = vmul.f32 %v52, -0.5
    %v537 = vmul.f32 %v53, -0.5
    %v538 = vmul.f32 %v54, -0.5
    %v539 = vmul.f32 %v71, 0.5
    %v540 = vmul.f32 %v72, 0.5
    %v541 = vmul.f32 %v73, 0.5
    %v542 = vmul.f32 %v74, 0.5
    %v543 = vsub.f32 %v503, %v539
    %v544 = vsub.f32 %v504, %v540
    %v545 = vsub.f32 %v505, %v541
    %v546 = vsub.f32 %v506, %v542
    %v547 = vmax.f32 %v535, %v543
    %v548 = vmax.f32 %v536, %v544
    %v549 = vmax.f32 %v537, %v545
    %v550 = vmax.f32 %v538, %v546
    %v551 = vmul.f32 %v51, 0.5
    %v552 = vmul.f32 %v52, 0.5
    %v553 = vmul.f32 %v53, 0.5
    %v554 = vmul.f32 %v54, 0.5
    %v555 = vadd.f32 %v503, %v539
    %v556 = vadd.f32 %v504, %v540
    %v557 = vadd.f32 %v505, %v541
    %v558 = vadd.f32 %v506, %v542
    %v559 = vmin.f32 %v551, %v555
    %v560 = vmin.f32 %v552, %v556
    %v561 = vmin.f32 %v553, %v557
    %v562 = vmin.f32 %v554, %v558
    %v563 = vsub.f32 %v531, %v519
    %v564 = vsub.f32 %v532, %v520
    %v565 = vsub.f32 %v533, %v521
    %v566 = vsub.f32 %v534, %v522
    %v567 = vmax.f32 %v563, 0.0
    %v568 = vmax.f32 %v564, 0.0
    %v569 = vmax.f32 %v565, 0.0
    %v570 = vmax.f32 %v566, 0.0
    %v571 = vsub.f32 %v559, %v547
    %v572 = vsub.f32 %v560, %v548
    %v573 = vsub.f32 %v561, %v549
    %v574 = vsub.f32 %v562, %v550
    %v575 = vmax.f32 %v571, 0.0
    %v576 = vmax.f32 %v572, 0.0
    %v577 = vmax.f32 %v573, 0.0
    %v578 = vmax.f32 %v574, 0.0
    %v579 = vmul.f32 %v567, %v575
    %v580 = vmul.f32 %v568, %v576
    %v581 = vmul.f32 %v569, %v577
    %v582 = vmul.f32 %v570, %v578
    %v583 = vmul.f32 %v46, %v51
    %v584 = vmul.f32 %v47, %v52
    %v585 = vmul.f32 %v48, %v53
    %v586 = vmul.f32 %v49, %v54
    %v587 = vmul.f32 %v66, %v71
    %v588 = vmul.f32 %v67, %v72
    %v589 = vmul.f32 %v68, %v73
    %v590 = vmul.f32 %v69, %v74
    %v591 = vadd.f32 %v583, %v587
    %v592 = vadd.f32 %v584, %v588
    %v593 = vadd.f32 %v585, %v589
    %v594 = vadd.f32 %v586, %v590
    %v595 = vsub.f32 %v591, %v579
    %v596 = vsub.f32 %v592, %v580
    %v597 = vsub.f32 %v593, %v581
    %v598 = vsub.f32 %v594, %v582
    %v599 = vadd.f32 %v595, 1e-08
    %v600 = vadd.f32 %v596, 1e-08
    %v601 = vadd.f32 %v597, 1e-08
    %v602 = vadd.f32 %v598, 1e-08
    %v603 = vrcp.pop %v599
    %v604 = vrcp.pop %v600
    %v605 = vrcp.pop %v601
    %v606 = vrcp.pop %v602
    %v607 = vmul.f32 %v579, %v603
    %v608 = vmul.f32 %v580, %v604
    %v609 = vmul.f32 %v581, %v605
    %v610 = vmul.f32 %v582, %v606
    %s611 = sadd.s32 0, 0
    %v612 = vlaneseq
    %v613 = vshrl.u32 %v612, 7
    %v614 = vadd.s32 %v613, 8
    %v615 = vadd.s32 %v613, 16
    %v616 = vadd.s32 %v613, 24
    %v617 = vlaneseq
    %v618 = vand.u32 %v617, 127
    %s619 = smul.u32 %s611, 32
    %v620 = vstv %s619
    %v621 = vadd.s32 %v620, %v613
    %v622 = vadd.s32 %v620, %v614
    %v623 = vadd.s32 %v620, %v615
    %v624 = vadd.s32 %v620, %v616
    %v625 = vmul.u32 %v621, 128
    %v626 = vmul.u32 %v622, 128
    %v627 = vmul.u32 %v623, 128
    %v628 = vmul.u32 %v624, 128
    %v629 = vadd.s32 %v625, %v618
    %v630 = vadd.s32 %v626, %v618
    %v631 = vadd.s32 %v627, %v618
    %v632 = vadd.s32 %v628, %v618
    %s633 = sld [smem:[#allocation3]]
    %v634 = vstv %s633
    %vm635 = vcmp.lt.s32.totalorder %v629, %v634
    %vm636 = vcmp.lt.s32.totalorder %v630, %v634
    %vm637 = vcmp.lt.s32.totalorder %v631, %v634
    %vm638 = vcmp.lt.s32.totalorder %v632, %v634
    %v639 = vsub.f32 1.0, %v607
    %v640 = vsub.f32 1.0, %v608
    %v641 = vsub.f32 1.0, %v609
    %v642 = vsub.f32 1.0, %v610
    %v643 = vsel %vm635, %v639, 0.0
    %v644 = vsel %vm636, %v640, 0.0
    %v645 = vsel %vm637, %v641, 0.0
    %v646 = vsel %vm638, %v642, 0.0
    %v647 = vld [vmem:[#allocation7] sm:$0x1]
    %v648 = vadd.f32 %v643, %v644
    %v649 = vadd.f32 %v648, %v645
    %v650 = vadd.f32 %v649, %v646
    %v651 = vrot.slane %v650, 4
    %v652 = vadd.f32 %v650, %v651
    %v653 = vrot.slane %v652, 2
    %v654 = vadd.f32 %v652, %v653
    %v655 = vrot.slane %v654, 1
    %v656 = vadd.f32 %v654, %v655
    %v657 = vadd.f32 %v647, %v656
    %658 = vst [vmem:[#allocation7] sm:$0x1] %v657
    // Predicated region
    $region14: #{tpu_custom_call.1} parent=1 // pred_check
      _
    $region15: #{tpu_custom_call.1} parent=1 // pred_check_branch
      %660 = sbr.rel (0) target = $region17
    $region16: #{tpu_custom_call.1} parent=1 // pred_region
      %s662 = ssub.s32 16, 16
      %663 = vsyncadd [#allocation6], %s662
      %s665 = sshll.u32 [#allocation7], 4
      %s666 = int_to_ptr.vmem [resolvable:$true] %s665
      %668 = dma.vmem_to_hbm [thread:$0]  %s666, 16, %s2, [#allocation6]
    $region17: #{tpu_custom_call.1} parent=1 // pred_fallthru
      _
    // Predicated region
    $region18: #{tpu_custom_call.1} parent=1 // pred_check
      _
    $region19: #{tpu_custom_call.1} parent=1 // pred_check_branch
      %670 = sbr.rel (0) target = $region21
    $region20: #{tpu_custom_call.1} parent=1 // pred_region
      %671 = dma.done [#allocation6], 16
    $region21: #{tpu_custom_call.1} parent=1 // pred_fallthru
      _
    %672 = vsyncpa [#allocation5], 1
    %673 = vsyncpa [#allocation6], 1

</llo_original>
